<compile_context>
chip_gen: v7x
topology: tpu7x:2x2x1
jax: 0.10.0
libtpu: 0.0.40
codegen_flags: <defaults>
</compile_context>

<pallas_src>
import functools

import jax
import jax.numpy as jnp
from jax.experimental import pallas as pl
from jax.experimental.pallas import tpu as pltpu

_MIB = 1024 * 1024


def _round_up(x, m):
    return ((x + m - 1) // m) * m


# ----------------------------------------------------------------------------
# Kernel
# ----------------------------------------------------------------------------
def fnn_kernel(x_ref, w1_ref, b1_ref, w2_ref, b2_ref, o_ref):
    # x_ref:  (TB, D_in)    activation dtype (f32 or bf16)
    # w1_ref: (D_in, D_hid) bf16, b1_ref: (1, D_hid) f32
    # w2_ref: (D_hid, D_out) bf16, b2_ref: (1, D_out) f32
    # o_ref:  (TB, D_out)   output dtype

    # Cast activations to the MXU dtype on the VPU (hidden under the matmul).
    x = x_ref[...].astype(w1_ref.dtype)

    # fc1: bf16 x bf16 -> f32 accumulation on the MXU.
    h = jnp.dot(x, w1_ref[...], preferred_element_type=jnp.float32)
    # bias + ReLU in f32 on the VPU.
    h = jnp.maximum(h + b1_ref[...], 0.0)

    # fc2: cast intermediate back to bf16 so the second matmul also takes the
    # fast single-pass MXU path.
    y = jnp.dot(h.astype(w2_ref.dtype), w2_ref[...],
                preferred_element_type=jnp.float32)
    # bias + sigmoid in f32 (EUP slot, essentially free next to the MXU).
    y = jax.nn.sigmoid(y + b2_ref[...])

    o_ref[...] = y.astype(o_ref.dtype)


# ----------------------------------------------------------------------------
# Hardware-aware configuration
# ----------------------------------------------------------------------------
def _tpu_generation_config():
    kind = ""
    try:
        kind = jax.devices()[0].device_kind.lower()
    except Exception:
        pass
    vmem_phys = None
    try:
        vmem_phys = int(pltpu.get_tpu_info().vmem_capacity_bytes)
    except Exception:
        pass

    if "v7" in kind:
        cfg = dict(vmem_limit=48 * _MIB, budget=36 * _MIB, m_floor=256,
                   max_rows=512, target_grid=4)
    elif "v6" in kind:
        cfg = dict(vmem_limit=100 * _MIB, budget=96 * _MIB, m_floor=256,
                   max_rows=1024, target_grid=2)
    elif "v5e" in kind or "v5 lite" in kind or "v5lite" in kind:
        cfg = dict(vmem_limit=100 * _MIB, budget=96 * _MIB, m_floor=128,
                   max_rows=1024, target_grid=2)
    else:  # unknown generation: conservative
        cfg = dict(vmem_limit=48 * _MIB, budget=32 * _MIB, m_floor=128,
                   max_rows=512, target_grid=2)

    if vmem_phys is not None:
        # Leave headroom for Mosaic-internal scratch / matmul staging.
        cfg["vmem_limit"] = min(cfg["vmem_limit"], int(vmem_phys * 0.75))
        cfg["budget"] = min(cfg["budget"], int(vmem_phys * 0.6))
    return cfg


@functools.lru_cache(maxsize=None)
def _single_buffer_supported():
    """One-time probe: can we single-buffer a constant-index block?"""
    try:
        const_spec = pl.BlockSpec((8, 128), lambda i: (0, 0),
                                  pipeline_mode=pl.Buffered(1))

        def _probe(c_ref, x_ref, o_ref):
            o_ref[...] = x_ref[...] + c_ref[...]

        out = pl.pallas_call(
            _probe,
            out_shape=jax.ShapeDtypeStruct((8, 128), jnp.float32),
            grid=(1,),
            in_specs=[const_spec, pl.BlockSpec((8, 128), lambda i: (i, 0))],
            out_specs=pl.BlockSpec((8, 128), lambda i: (i, 0)),
        )(jnp.zeros((8, 128), jnp.float32), jnp.zeros((8, 128), jnp.float32))
        jax.block_until_ready(out)
        return True
    except Exception:
        return False


# ----------------------------------------------------------------------------
# One-time parameter preparation (pad to lane-dense 128 multiples + bf16 cast)
# ----------------------------------------------------------------------------
def prepare_params(w1, b1, w2, b2, *, compute_dtype=jnp.bfloat16):
    """Pad feature dims to multiples of 128 and cast weights to the MXU dtype.

    Call ONCE and reuse the result across forward calls so the per-call HBM
    traffic is only the kernel's own reads.
    w1: (d_in, d_hid), b1: (d_hid,), w2: (d_hid, d_out), b2: (d_out,)."""
    d_in, d_hid = w1.shape
    d_out = w2.shape[1]
    d_in_p, d_hid_p, d_out_p = (_round_up(d, 128) for d in (d_in, d_hid, d_out))

    w1p = jnp.pad(w1, ((0, d_in_p - d_in), (0, d_hid_p - d_hid))).astype(compute_dtype)
    w2p = jnp.pad(w2, ((0, d_hid_p - d_hid), (0, d_out_p - d_out))).astype(compute_dtype)
    # Biases stay f32 for the f32 elementwise epilogue.
    b1p = jnp.pad(b1, (0, d_hid_p - d_hid)).astype(jnp.float32).reshape(1, d_hid_p)
    b2p = jnp.pad(b2, (0, d_out_p - d_out)).astype(jnp.float32).reshape(1, d_out_p)
    return w1p, b1p, w2p, b2p


# ----------------------------------------------------------------------------
# Forward
# ----------------------------------------------------------------------------
def fnn_forward(x, w1p, b1p, w2p, b2p, *, d_out, block_b=None):
    """x: (B, d_in); prepared padded params; returns (B, d_out) in x.dtype."""
    B, d_in = x.shape
    d_in_p, d_hid_p = w1p.shape
    d_out_p = w2p.shape[1]
    out_dtype = x.dtype

    cfg = _tpu_generation_config()

    bytes_x = jnp.dtype(x.dtype).itemsize
    bytes_c = jnp.dtype(w1p.dtype).itemsize
    bytes_o = jnp.dtype(out_dtype).itemsize

    # Pad activation features only if needed; no dtype cast in the wrapper.
    x_in = jnp.pad(x, ((0, 0), (0, d_in_p - d_in))) if d_in_p > d_in else x

    # Resident (single-buffered) weight footprint.
    w_resident = ((d_in_p * d_hid_p + d_hid_p * d_out_p) * bytes_c
                  + (d_hid_p + d_out_p) * 4)

    # Per-row VMEM: double-buffered x/out tiles + f32 h + bf16 copy of h + f32 y.
    per_row = (2 * d_in_p * bytes_x + 2 * d_out_p * bytes_o
               + (4 + bytes_c) * d_hid_p + 4 * d_out_p)

    budget = cfg["budget"]
    if w_resident + 16 * per_row > budget:
        # TODO(synk): add d_hid/d_out grid tiling with a VMEM f32 accumulator so
        # large weights need not be fully resident (bites first on v7x 64 MiB).
        raise ValueError(
            f"FNN padded weights ({w_resident / _MIB:.1f} MiB) do not fit the "
            f"VMEM budget ({budget / _MIB:.1f} MiB); feature-dim tiling needed.")

    b_pad16 = _round_up(B, 16)
    if block_b is None:
        budget_rows = (budget - w_resident) // per_row
        budget_rows = max(16, (budget_rows // 16) * 16)
        block_b = min(cfg["max_rows"], budget_rows, b_pad16)
        block_b = max(16, (block_b // 16) * 16)
        # Fill the MXU M dimension for this generation when batch & VMEM allow.
        if block_b < cfg["m_floor"] <= min(b_pad16, budget_rows):
            block_b = cfg["m_floor"]
        # Prefer >= target_grid steps (pipelining + megacore sharding), but
        # never drop the per-step block below the MXU M floor; tiny batches
        # keep a single step (avoids duplicated weight DMA across cores).
        n_steps = -(-b_pad16 // block_b)
        if n_steps < cfg["target_grid"]:
            cand = _round_up(-(-b_pad16 // cfg["target_grid"]), 16)
            if cand >= cfg["m_floor"]:
                block_b = cand
    # bf16 packs 16 rows per sublane group: keep tiles 16-row aligned.
    block_b = max(16, (block_b // 16) * 16)

    B_pad = _round_up(B, block_b)
    if B_pad > B:
        x_in = jnp.pad(x_in, ((0, B_pad - B), (0, 0)))
    grid = (B_pad // block_b,)

    single_buf = _single_buffer_supported()

    def _const_spec(shape):
        # Constant block index -> never re-fetched -> one buffer is enough.
        if single_buf:
            return pl.BlockSpec(shape, lambda i: (0, 0),
                                pipeline_mode=pl.Buffered(1))
        return pl.BlockSpec(shape, lambda i: (0, 0))

    cost = pl.CostEstimate(
        flops=2 * B_pad * (d_in_p * d_hid_p + d_hid_p * d_out_p),
        transcendentals=B_pad * d_out_p,
        bytes_accessed=(B_pad * d_in_p * bytes_x
                        + w_resident
                        + B_pad * d_out_p * bytes_o),
    )

    dim_sem = ("parallel",) if grid[0] > 1 else ("arbitrary",)

    out_padded = pl.pallas_call(
        fnn_kernel,
        out_shape=jax.ShapeDtypeStruct((B_pad, d_out_p), out_dtype),
        grid_spec=pltpu.PrefetchScalarGridSpec(
            num_scalar_prefetch=0,
            grid=grid,
            in_specs=[
                pl.BlockSpec((block_b, d_in_p), lambda i: (i, 0)),
                _const_spec((d_in_p, d_hid_p)),
                _const_spec((1, d_hid_p)),
                _const_spec((d_hid_p, d_out_p)),
                _const_spec((1, d_out_p)),
            ],
            out_specs=pl.BlockSpec((block_b, d_out_p), lambda i: (i, 0)),
        ),
        compiler_params=pltpu.CompilerParams(
            dimension_semantics=dim_sem,
            vmem_limit_bytes=cfg["vmem_limit"]),
        cost_estimate=cost,
    )(x_in, w1p, b1p, w2p, b2p)

    # Strip batch and lane padding.
    return out_padded[:B, :d_out]


# ----------------------------------------------------------------------------
# Reference-matching init (nn.Linear: U(-1/sqrt(fan_in), 1/sqrt(fan_in)))
# ----------------------------------------------------------------------------
def init_params(key, input_size, output_size):
    hidden = input_size // 2
    k1, k2, k3, k4 = jax.random.split(key, 4)
    bound1 = 1.0 / (input_size ** 0.5)
    bound2 = 1.0 / (hidden ** 0.5)
    # Stored already transposed to (in, out).
    w1 = jax.random.uniform(k1, (input_size, hidden), jnp.float32, -bound1, bound1)
    b1 = jax.random.uniform(k2, (hidden,), jnp.float32, -bound1, bound1)
    w2 = jax.random.uniform(k3, (hidden, output_size), jnp.float32, -bound2, bound2)
    b2 = jax.random.uniform(k4, (output_size,), jnp.float32, -bound2, bound2)
    return w1, b1, w2, b2


if __name__ == "__main__":
    key = jax.random.PRNGKey(0)
    kx, kp = jax.random.split(key)

    batch = 8
    input_size = 32
    output_size = 8

    x = jax.random.normal(kx, (batch, input_size), jnp.float32)
    w1, b1, w2, b2 = init_params(kp, input_size, output_size)

    # One-time weight preparation (padded + bf16); reuse across calls.
    w1p, b1p, w2p, b2p = jax.block_until_ready(prepare_params(w1, b1, w2, b2))

    fwd = jax.jit(functools.partial(fnn_forward, d_out=output_size))
    out = jax.block_until_ready(fwd(x, w1p, b1p, w2p, b2p))

    # Reference check in plain JAX f32 (same math as the PyTorch module).
    # bf16 matmul operands with f32 accumulation -> bf16-level tolerance.
    h_ref = jnp.maximum(x @ w1 + b1, 0.0)
    y_ref = jax.nn.sigmoid(h_ref @ w2 + b2)
    assert out.shape == (batch, output_size)
    assert jnp.allclose(out, y_ref, atol=2e-2, rtol=2e-2), (
        float(jnp.max(jnp.abs(out - y_ref))))

    print("KERNEL_OK")
</pallas_src>

<mosaic_0001>
module attributes {stable_mosaic.version = 11 : i64} {
  func.func @fnn_kernel(%arg0: i32, %arg1: memref<16x128xf32, #tpu.memory_space<vmem>>, %arg2: memref<128x128xbf16, #tpu.memory_space<vmem>>, %arg3: memref<1x128xf32, #tpu.memory_space<vmem>>, %arg4: memref<128x128xbf16, #tpu.memory_space<vmem>>, %arg5: memref<1x128xf32, #tpu.memory_space<vmem>>, %arg6: memref<16x128xf32, #tpu.memory_space<vmem>>) attributes {dimension_semantics = [#tpu.dimension_semantics<arbitrary>], iteration_bounds = array<i64: 1>, scalar_prefetch = 0 : i64, scratch_operands = 0 : i64, tpu.core_type = #tpu.core_type<tc>, window_params = [{transform_indices = @transform_0, window_bounds = array<i64: 16, 128>}, {pipeline_mode = #tpu.pipeline_mode<synchronous>, transform_indices = @transform_1, window_bounds = array<i64: 128, 128>}, {pipeline_mode = #tpu.pipeline_mode<synchronous>, transform_indices = @transform_2, window_bounds = array<i64: 1, 128>}, {pipeline_mode = #tpu.pipeline_mode<synchronous>, transform_indices = @transform_3, window_bounds = array<i64: 128, 128>}, {pipeline_mode = #tpu.pipeline_mode<synchronous>, transform_indices = @transform_4, window_bounds = array<i64: 1, 128>}, {transform_indices = @transform_5, window_bounds = array<i64: 16, 128>}]} {
    %c0 = arith.constant 0 : index
    %c0_0 = arith.constant 0 : index
    %0 = vector.load %arg1[%c0, %c0_0] : memref<16x128xf32, #tpu.memory_space<vmem>>, vector<16x128xf32>
    %1 = arith.truncf %0 : vector<16x128xf32> to vector<16x128xbf16>
    %c0_1 = arith.constant 0 : index
    %c0_2 = arith.constant 0 : index
    %2 = vector.load %arg2[%c0_1, %c0_2] : memref<128x128xbf16, #tpu.memory_space<vmem>>, vector<128x128xbf16>
    %cst = arith.constant dense<0.000000e+00> : vector<16x128xf32>
    %3 = tpu.matmul %1, %2, %cst {dimension_numbers = #tpu.dot_dimension_numbers<[1], [0], [0], [1], [0, 0, 1, 1], [], []>} : vector<16x128xbf16>, vector<128x128xbf16>, vector<16x128xf32> -> vector<16x128xf32>
    %c0_3 = arith.constant 0 : index
    %c0_4 = arith.constant 0 : index
    %4 = vector.load %arg3[%c0_3, %c0_4] : memref<1x128xf32, #tpu.memory_space<vmem>>, vector<1x128xf32>
    %5 = vector.broadcast %4 : vector<1x128xf32> to vector<16x128xf32>
    %6 = arith.addf %3, %5 : vector<16x128xf32>
    %cst_5 = arith.constant 0.000000e+00 : f32
    %7 = vector.broadcast %cst_5 : f32 to vector<16x128xf32>
    %8 = arith.maximumf %6, %7 : vector<16x128xf32>
    %9 = arith.truncf %8 : vector<16x128xf32> to vector<16x128xbf16>
    %c0_6 = arith.constant 0 : index
    %c0_7 = arith.constant 0 : index
    %10 = vector.load %arg4[%c0_6, %c0_7] : memref<128x128xbf16, #tpu.memory_space<vmem>>, vector<128x128xbf16>
    %cst_8 = arith.constant dense<0.000000e+00> : vector<16x128xf32>
    %11 = tpu.matmul %9, %10, %cst_8 {dimension_numbers = #tpu.dot_dimension_numbers<[1], [0], [0], [1], [0, 0, 1, 1], [], []>} : vector<16x128xbf16>, vector<128x128xbf16>, vector<16x128xf32> -> vector<16x128xf32>
    %c0_9 = arith.constant 0 : index
    %c0_10 = arith.constant 0 : index
    %12 = vector.load %arg5[%c0_9, %c0_10] : memref<1x128xf32, #tpu.memory_space<vmem>>, vector<1x128xf32>
    %13 = vector.broadcast %12 : vector<1x128xf32> to vector<16x128xf32>
    %14 = arith.addf %11, %13 : vector<16x128xf32>
    %15 = arith.negf %14 : vector<16x128xf32>
    %16 = math.exp %15 : vector<16x128xf32>
    %cst_11 = arith.constant 1.000000e+00 : f32
    %17 = vector.broadcast %cst_11 : f32 to vector<16x128xf32>
    %18 = arith.addf %17, %16 : vector<16x128xf32>
    %19 = arith.divf %17, %18 : vector<16x128xf32>
    %c0_12 = arith.constant 0 : index
    %c0_13 = arith.constant 0 : index
    %20 = vector.load %arg6[%c0_12, %c0_13] : memref<16x128xf32, #tpu.memory_space<vmem>>, vector<16x128xf32>
    tpu.vector_store %arg6[%c0_12, %c0_13], %19 {strides = array<i32>} : memref<16x128xf32, #tpu.memory_space<vmem>>, vector<16x128xf32>,
    return
  }
  func.func @transform_0(%arg0: i32) -> (i32, i32) {
    %c0_i32 = arith.constant 0 : i32
    %c0_i32_0 = arith.constant 0 : i32
    return %arg0, %c0_i32 : i32, i32
  }
  func.func @transform_1(%arg0: i32) -> (i32, i32) {
    %c0_i32 = arith.constant 0 : i32
    %c0_i32_0 = arith.constant 0 : i32
    %c0_i32_1 = arith.constant 0 : i32
    return %c0_i32, %c0_i32_0 : i32, i32
  }
  func.func @transform_2(%arg0: i32) -> (i32, i32) {
    %c0_i32 = arith.constant 0 : i32
    %c0_i32_0 = arith.constant 0 : i32
    %c0_i32_1 = arith.constant 0 : i32
    return %c0_i32, %c0_i32_0 : i32, i32
  }
  func.func @transform_3(%arg0: i32) -> (i32, i32) {
    %c0_i32 = arith.constant 0 : i32
    %c0_i32_0 = arith.constant 0 : i32
    %c0_i32_1 = arith.constant 0 : i32
    return %c0_i32, %c0_i32_0 : i32, i32
  }
  func.func @transform_4(%arg0: i32) -> (i32, i32) {
    %c0_i32 = arith.constant 0 : i32
    %c0_i32_0 = arith.constant 0 : i32
    %c0_i32_1 = arith.constant 0 : i32
    return %c0_i32, %c0_i32_0 : i32, i32
  }
  func.func @transform_5(%arg0: i32) -> (i32, i32) {
    %c0_i32 = arith.constant 0 : i32
    %c0_i32_0 = arith.constant 0 : i32
    return %arg0, %c0_i32 : i32, i32
  }
}

</mosaic_0001>

<llo_original>
// kernel: fnn_forward.1
$region0: #{fnn_forward.1}
  #allocation0 [shape = 'u32[]', space=smem, size = 0x4, offset = 0x4, fixed_abs, tag = 'smem constant byte address 0x4 - core index']
  #allocation1 [shape = 'u32[144,128]{1,0:T(1,128)}', space=vmem, size = 0x12000, scoped, tag = 'internal scratch']
  %s0 = inlined_call_operand.vmem [shape: f32[16,128], index: 0, kind: input, shape index: {}]
  %s1 = inlined_call_operand.hbm [shape: bf16[128,128], index: 1, kind: input, shape index: {}]
  %s2 = inlined_call_operand.vmem [shape: f32[1,128], index: 2, kind: input, shape index: {}]
  %s3 = inlined_call_operand.hbm [shape: bf16[128,128], index: 3, kind: input, shape index: {}]
  %s4 = inlined_call_operand.vmem [shape: f32[1,128], index: 4, kind: input, shape index: {}]
  %s5 = inlined_call_operand.vmem [shape: f32[16,128], index: 5, kind: output, shape index: {}]
  %s6 = sld [smem:[#allocation0]]
  $region38: #{fnn_forward.1} parent=0
    _
  %s8 = ssub.s32 1, %s6
  %s9 = scalar_select 0, %s8, %s6
  $region1: #{fnn_forward.1} parent=0
    #allocation2 [shape = 'u8[32768]{0}', space=vmem, size = 0x8000, scoped, tag = 'input window, operand 1, single buffered']
    #allocation3 [shape = 's32[1]{0}', space=sflag, size = 0x4, scoped, tag = 'scoped memory for fnn_forward.1']
    #allocation4 [shape = 'u8[32768]{0}', space=vmem, size = 0x8000, scoped, tag = 'input window, operand 3, single buffered']
    #allocation5 [shape = 's32[1]{0}', space=sflag, size = 0x4, scoped, tag = 'scoped memory for fnn_forward.1']
    %10 = vsyncpa [#allocation3], 0
    %11 = vsyncpa [#allocation5], 0
    // Predicated region
    $region2: #{fnn_forward.1} parent=1 // pred_check
      _
    $region3: #{fnn_forward.1} parent=1 // pred_check_branch
      %13 = sbr.rel (0) target = $region5
    $region4: #{fnn_forward.1} parent=1 // pred_region
      _
    $region5: #{fnn_forward.1} parent=1 // pred_fallthru
      _
    // Predicated region
    $region6: #{fnn_forward.1} parent=1 // pred_check
      _
    $region7: #{fnn_forward.1} parent=1 // pred_check_branch
      %15 = sbr.rel (0) target = $region9
    $region8: #{fnn_forward.1} parent=1 // pred_region
      %s17 = ssub.s32 1024, 1024
      %18 = vsyncadd [#allocation3], %s17
      %s19 = sshll.u32 [#allocation2], 4
      %s20 = int_to_ptr.vmem [resolvable:$true] %s19
      %25 = dma.hbm_to_vmem [thread:$0]  %s1, 1024, %s20, [#allocation3], 64, 64, 4
    $region9: #{fnn_forward.1} parent=1 // pred_fallthru
      _
    // Predicated region
    $region10: #{fnn_forward.1} parent=1 // pred_check
      _
    $region11: #{fnn_forward.1} parent=1 // pred_check_branch
      %27 = sbr.rel (0) target = $region13
    $region12: #{fnn_forward.1} parent=1 // pred_region
      _
    $region13: #{fnn_forward.1} parent=1 // pred_fallthru
      _
    // Predicated region
    $region14: #{fnn_forward.1} parent=1 // pred_check
      _
    $region15: #{fnn_forward.1} parent=1 // pred_check_branch
      %29 = sbr.rel (0) target = $region17
    $region16: #{fnn_forward.1} parent=1 // pred_region
      %s31 = ssub.s32 1024, 1024
      %32 = vsyncadd [#allocation5], %s31
      %s33 = sshll.u32 [#allocation4], 4
      %s34 = int_to_ptr.vmem [resolvable:$true] %s33
      %39 = dma.hbm_to_vmem [thread:$0]  %s3, 1024, %s34, [#allocation5], 64, 64, 4
    $region17: #{fnn_forward.1} parent=1 // pred_fallthru
      _
    // Predicated region
    $region18: #{fnn_forward.1} parent=1 // pred_check
      _
    $region19: #{fnn_forward.1} parent=1 // pred_check_branch
      %41 = sbr.rel (0) target = $region21
    $region20: #{fnn_forward.1} parent=1 // pred_region
      _
    $region21: #{fnn_forward.1} parent=1 // pred_fallthru
      _
    // Predicated region
    $region22: #{fnn_forward.1} parent=1 // pred_check
      _
    $region23: #{fnn_forward.1} parent=1 // pred_check_branch
      %43 = sbr.rel (0) target = $region25
    $region24: #{fnn_forward.1} parent=1 // pred_region
      %44 = dma.done [#allocation3], 1024
    $region25: #{fnn_forward.1} parent=1 // pred_fallthru
      _
    // Predicated region
    $region26: #{fnn_forward.1} parent=1 // pred_check
      _
    $region27: #{fnn_forward.1} parent=1 // pred_check_branch
      %46 = sbr.rel (0) target = $region29
    $region28: #{fnn_forward.1} parent=1 // pred_region
      %47 = dma.done [#allocation5], 1024
    $region29: #{fnn_forward.1} parent=1 // pred_fallthru
      _
    %v49 = vld [vmem:[%s0] sm:$0xff]
    %v50 = vld [vmem:[%s0 + $0x8] sm:$0xff]
    %v51 = vpack.c.bf16 %v50, %v49
    %v52 = vld [vmem:[#allocation2] sm:$0xf]
    %v53 = vld [vmem:[#allocation2 + $0x4] sm:$0xf]
    %v54 = vld [vmem:[#allocation2 + $0x8] sm:$0xf]
    %v55 = vld [vmem:[#allocation2 + $0xc] sm:$0xf]
    %v56 = vld [vmem:[#allocation2 + $0x10] sm:$0xf]
    %v57 = vld [vmem:[#allocation2 + $0x14] sm:$0xf]
    %v58 = vld [vmem:[#allocation2 + $0x18] sm:$0xf]
    %v59 = vld [vmem:[#allocation2 + $0x1c] sm:$0xf]
    %v60 = vld [vmem:[#allocation2 + $0x20] sm:$0xf]
    %v61 = vld [vmem:[#allocation2 + $0x24] sm:$0xf]
    %v62 = vld [vmem:[#allocation2 + $0x28] sm:$0xf]
    %v63 = vld [vmem:[#allocation2 + $0x2c] sm:$0xf]
    %v64 = vld [vmem:[#allocation2 + $0x30] sm:$0xf]
    %v65 = vld [vmem:[#allocation2 + $0x34] sm:$0xf]
    %v66 = vld [vmem:[#allocation2 + $0x38] sm:$0xf]
    %v67 = vld [vmem:[#allocation2 + $0x3c] sm:$0xf]
    %v68 = vld [vmem:[%s2] sm:$0x1]
    %v70 = vlaneseq
    %v71 = vshrl.u32 %v70, 7
    %v72 = vsub.s32 0, %v71
    %v73 = vrot.slane %v68, %v72
    %v91 = vunpack.c.l.b16 %v52
    %v92 = vunpack.c.l.b16 %v53
    %v93 = vunpack.c.l.b16 %v54
    %v94 = vunpack.c.l.b16 %v55
    %v95 = vunpack.c.l.b16 %v56
    %v96 = vunpack.c.l.b16 %v57
    %v97 = vunpack.c.l.b16 %v58
    %v98 = vunpack.c.l.b16 %v59
    %v99 = vunpack.c.l.b16 %v60
    %v100 = vunpack.c.l.b16 %v61
    %v101 = vunpack.c.l.b16 %v62
    %v102 = vunpack.c.l.b16 %v63
    %v103 = vunpack.c.l.b16 %v64
    %v104 = vunpack.c.l.b16 %v65
    %v105 = vunpack.c.l.b16 %v66
    %v106 = vunpack.c.l.b16 %v67
    %v107 = vpack.c.b16 %v92, %v91
    %v108 = vpack.c.b16 %v94, %v93
    %v109 = vpack.c.b16 %v96, %v95
    %v110 = vpack.c.b16 %v98, %v97
    %v111 = vpack.c.b16 %v100, %v99
    %v112 = vpack.c.b16 %v102, %v101
    %v113 = vpack.c.b16 %v104, %v103
    %v114 = vpack.c.b16 %v106, %v105
    %123 = vmatprep.subr.bf16.mxu0 0
    %124 = vmatpush1.bf16.msra.mxu0 %v107
    %125 = vmatprep.subr.bf16.mxu0 0
    %126 = vmatpush1.bf16.msra.mxu0 %v108
    %127 = vmatprep.subr.bf16.mxu0 0
    %128 = vmatpush1.bf16.msra.mxu0 %v109
    %129 = vmatprep.subr.bf16.mxu0 0
    %130 = vmatpush1.bf16.msra.mxu0 %v110
    %131 = vmatprep.subr.bf16.mxu0 0
    %132 = vmatpush1.bf16.msra.mxu0 %v111
    %133 = vmatprep.subr.bf16.mxu0 0
    %134 = vmatpush1.bf16.msra.mxu0 %v112
    %135 = vmatprep.subr.bf16.mxu0 0
    %136 = vmatpush1.bf16.msra.mxu0 %v113
    %137 = vmatprep.subr.bf16.mxu0 0
    %138 = vmatpush1.bf16.msra.mxu0 %v114
    %139 = vmatprep.subr.bf16.mxu0 0
    %140 = vmatpush1.bf16.msra.mxu0 0
    %141 = vmatprep.subr.bf16.mxu0 0
    %142 = vmatpush1.bf16.msra.mxu0 0
    %143 = vmatprep.subr.bf16.mxu0 0
    %144 = vmatpush1.bf16.msra.mxu0 0
    %145 = vmatprep.subr.bf16.mxu0 0
    %146 = vmatpush1.bf16.msra.mxu0 0
    %147 = vmatprep.subr.bf16.mxu0 0
    %148 = vmatpush1.bf16.msra.mxu0 0
    %149 = vmatprep.subr.bf16.mxu0 0
    %150 = vmatpush1.bf16.msra.mxu0 0
    %151 = vmatprep.subr.bf16.mxu0 0
    %152 = vmatpush1.bf16.msra.mxu0 0
    %153 = vmatprep.subr.bf16.mxu0 0
    %154 = vmatpush1.bf16.msra.mxu0 0
    %155 = vmatprep.mubr.bf16.mxu0 0
    %156 = vmatmul.mubr.bf16.gmra.mrb[0].mxu0 %v51
    %v157 = vpop.f32.mrb[0].mxu0
    %v158 = vadd.f32 %v73, %v157
    %v159 = vpop.f32.mrb[0].mxu0
    %v160 = vpop.f32.mrb[0].mxu0
    %v161 = vadd.f32 %v73, %v160
    %v162 = vpop.f32.mrb[0].mxu0
    %163 = vdwg.mxu0
    %v164 = vmax.f32 %v158, 0.0
    %v165 = vmax.f32 %v161, 0.0
    %v166 = vpack.c.bf16 %v165, %v164
    %v167 = vld [vmem:[#allocation4] sm:$0xf]
    %v168 = vld [vmem:[#allocation4 + $0x4] sm:$0xf]
    %v169 = vld [vmem:[#allocation4 + $0x8] sm:$0xf]
    %v170 = vld [vmem:[#allocation4 + $0xc] sm:$0xf]
    %v171 = vld [vmem:[#allocation4 + $0x10] sm:$0xf]
    %v172 = vld [vmem:[#allocation4 + $0x14] sm:$0xf]
    %v173 = vld [vmem:[#allocation4 + $0x18] sm:$0xf]
    %v174 = vld [vmem:[#allocation4 + $0x1c] sm:$0xf]
    %v175 = vld [vmem:[#allocation4 + $0x20] sm:$0xf]
    %v176 = vld [vmem:[#allocation4 + $0x24] sm:$0xf]
    %v177 = vld [vmem:[#allocation4 + $0x28] sm:$0xf]
    %v178 = vld [vmem:[#allocation4 + $0x2c] sm:$0xf]
    %v179 = vld [vmem:[#allocation4 + $0x30] sm:$0xf]
    %v180 = vld [vmem:[#allocation4 + $0x34] sm:$0xf]
    %v181 = vld [vmem:[#allocation4 + $0x38] sm:$0xf]
    %v182 = vld [vmem:[#allocation4 + $0x3c] sm:$0xf]
    %v183 = vld [vmem:[%s4] sm:$0x1]
    %v185 = vlaneseq
    %v186 = vshrl.u32 %v185, 7
    %v187 = vsub.s32 0, %v186
    %v188 = vrot.slane %v183, %v187
    %v206 = vunpack.c.l.b16 %v167
    %v207 = vunpack.c.l.b16 %v168
    %v208 = vunpack.c.l.b16 %v169
    %v209 = vunpack.c.l.b16 %v170
    %v210 = vunpack.c.l.b16 %v171
    %v211 = vunpack.c.l.b16 %v172
    %v212 = vunpack.c.l.b16 %v173
    %v213 = vunpack.c.l.b16 %v174
    %v214 = vunpack.c.l.b16 %v175
    %v215 = vunpack.c.l.b16 %v176
    %v216 = vunpack.c.l.b16 %v177
    %v217 = vunpack.c.l.b16 %v178
    %v218 = vunpack.c.l.b16 %v179
    %v219 = vunpack.c.l.b16 %v180
    %v220 = vunpack.c.l.b16 %v181
    %v221 = vunpack.c.l.b16 %v182
    %v222 = vpack.c.b16 %v207, %v206
    %v223 = vpack.c.b16 %v209, %v208
    %v224 = vpack.c.b16 %v211, %v210
    %v225 = vpack.c.b16 %v213, %v212
    %v226 = vpack.c.b16 %v215, %v214
    %v227 = vpack.c.b16 %v217, %v216
    %v228 = vpack.c.b16 %v219, %v218
    %v229 = vpack.c.b16 %v221, %v220
    %238 = vmatprep.subr.bf16.mxu0 0
    %239 = vmatpush1.bf16.msra.mxu0 %v222
    %240 = vmatprep.subr.bf16.mxu0 0
    %241 = vmatpush1.bf16.msra.mxu0 %v223
    %242 = vmatprep.subr.bf16.mxu0 0
    %243 = vmatpush1.bf16.msra.mxu0 %v224
    %244 = vmatprep.subr.bf16.mxu0 0
    %245 = vmatpush1.bf16.msra.mxu0 %v225
    %246 = vmatprep.subr.bf16.mxu0 0
    %247 = vmatpush1.bf16.msra.mxu0 %v226
    %248 = vmatprep.subr.bf16.mxu0 0
    %249 = vmatpush1.bf16.msra.mxu0 %v227
    %250 = vmatprep.subr.bf16.mxu0 0
    %251 = vmatpush1.bf16.msra.mxu0 %v228
    %252 = vmatprep.subr.bf16.mxu0 0
    %253 = vmatpush1.bf16.msra.mxu0 %v229
    %254 = vmatprep.subr.bf16.mxu0 0
    %255 = vmatpush1.bf16.msra.mxu0 0
    %256 = vmatprep.subr.bf16.mxu0 0
    %257 = vmatpush1.bf16.msra.mxu0 0
    %258 = vmatprep.subr.bf16.mxu0 0
    %259 = vmatpush1.bf16.msra.mxu0 0
    %260 = vmatprep.subr.bf16.mxu0 0
    %261 = vmatpush1.bf16.msra.mxu0 0
    %262 = vmatprep.subr.bf16.mxu0 0
    %263 = vmatpush1.bf16.msra.mxu0 0
    %264 = vmatprep.subr.bf16.mxu0 0
    %265 = vmatpush1.bf16.msra.mxu0 0
    %266 = vmatprep.subr.bf16.mxu0 0
    %267 = vmatpush1.bf16.msra.mxu0 0
    %268 = vmatprep.subr.bf16.mxu0 0
    %269 = vmatpush1.bf16.msra.mxu0 0
    %270 = vmatprep.mubr.bf16.mxu0 0
    %271 = vmatmul.mubr.bf16.gmra.mrb[0].mxu0 %v166
    %v272 = vpop.f32.mrb[0].mxu0
    %v273 = vadd.f32 %v188, %v272
    %v274 = vpop.f32.mrb[0].mxu0
    %v275 = vpop.f32.mrb[0].mxu0
    %v276 = vadd.f32 %v188, %v275
    %v277 = vpop.f32.mrb[0].mxu0
    %278 = vdwg.mxu0
    %v279 = vxor.u32 %v273, 2147483648
    %v280 = vxor.u32 %v276, 2147483648
    %v281 = vmul.f32 %v279, 1.442695
    %v282 = vpow.pop %v281
    %v283 = vmul.f32 %v280, 1.442695
    %v284 = vpow.pop %v283
    %v285 = vadd.f32 %v282, 1.0
    %v286 = vadd.f32 %v284, 1.0
    %v287 = vrcp.pop %v285
    %v288 = vmul.f32 1.0, %v287
    %v289 = vrcp.pop %v286
    %v290 = vmul.f32 1.0, %v289
    %291 = vst [vmem:[%s5] sm:$0xff] %v288
    %292 = vst [vmem:[%s5 + $0x8] sm:$0xff] %v290
    // Predicated region
    $region30: #{fnn_forward.1} parent=1 // pred_check
      _
    $region31: #{fnn_forward.1} parent=1 // pred_check_branch
      %294 = sbr.rel (0) target = $region33
    $region32: #{fnn_forward.1} parent=1 // pred_region
      _
    $region33: #{fnn_forward.1} parent=1 // pred_fallthru
      _
    // Predicated region
    $region34: #{fnn_forward.1} parent=1 // pred_check
      _
    $region35: #{fnn_forward.1} parent=1 // pred_check_branch
      %296 = sbr.rel (0) target = $region37
    $region36: #{fnn_forward.1} parent=1 // pred_region
      _
    $region37: #{fnn_forward.1} parent=1 // pred_fallthru
      _
    %297 = vsyncpa [#allocation3], 1
    %298 = vsyncpa [#allocation5], 1

</llo_original>
